<compile_context>
chip_gen: v5e
topology: v5e:2x2
jax: 0.10.0
libtpu: 0.0.40
codegen_flags: <defaults>
</compile_context>

<pallas_src>
import math

import jax
import jax.numpy as jnp
from jax.experimental import pallas as pl
from jax.experimental.pallas import tpu as pltpu


NUM_FEATURES = 4    # CartPole-v1 observation dim (logical)
NUM_ACTIONS = 2     # CartPole-v1 action dim (logical)
HIDDEN = 100        # logical hidden width

H_PAD = 128         # padded hidden dim (one full lane group / MXU K)
A_PAD = 8           # padded action dim (2 -> 8); kept narrow because output
                    # HBM writeback is the binding resource for this kernel


def _round_up(x, m):
    return ((x + m - 1) // m) * m


def dqn_kernel(x_ref, w1_ref, w2_ref, w3_ref, b_ref, o_ref):
    """Fused 3-layer MLP on one (TB, 4) activation tile, all in VMEM.

    b_ref packs the biases: row 0 = b1, row 1 = b2, row 2 = b3 (first A_PAD
    lanes), remaining rows/lanes zero.
    """
    x = x_ref[...]                               # (TB, 4)
    b1 = b_ref[0:1, :]                           # (1, H_PAD)
    b2 = b_ref[1:2, :]                           # (1, H_PAD)
    b3 = b_ref[2:3, :][:, :A_PAD]                # (1, A_PAD) value-slice

    h1 = jnp.dot(x, w1_ref[...], preferred_element_type=jnp.float32) + b1
    h1 = jnp.maximum(h1, 0.0)
    h2 = jnp.dot(h1, w2_ref[...], preferred_element_type=jnp.float32) + b2
    h2 = jnp.maximum(h2, 0.0)
    out = jnp.dot(h2, w3_ref[...], preferred_element_type=jnp.float32) + b3
    o_ref[...] = out.astype(o_ref.dtype)


def _pad_params(params):
    """Zero-pad logical (4/100/2) params to (4/H_PAD/A_PAD) shapes.

    Zero-padded weight rows/cols and zero biases are inert through the
    matmuls and ReLU, so semantics are unchanged.
    """
    w1, b1, w2, b2, w3, b3 = params
    w1p = jnp.zeros((NUM_FEATURES, H_PAD), jnp.float32).at[:, :HIDDEN].set(w1)
    w2p = jnp.zeros((H_PAD, H_PAD), jnp.float32).at[:HIDDEN, :HIDDEN].set(w2)
    w3p = jnp.zeros((H_PAD, A_PAD), jnp.float32).at[:HIDDEN, :NUM_ACTIONS].set(w3)
    bp = jnp.zeros((8, H_PAD), jnp.float32)
    bp = bp.at[0, :HIDDEN].set(b1.reshape(-1))
    bp = bp.at[1, :HIDDEN].set(b2.reshape(-1))
    bp = bp.at[2, :NUM_ACTIONS].set(b3.reshape(-1))
    return w1p, w2p, w3p, bp


def _choose_tiling(B, tb_max):
    """Pick (TB, Bp, steps) so padding stays bounded and v7x gets >=2 steps."""
    B8 = _round_up(max(B, 1), 8)
    steps = max(1, math.ceil(B8 / tb_max))
    # v7x: ensure the "parallel" batch axis has >= 2 steps so both TensorCores
    # get work — but only when the batch is large enough that the extra
    # ~0.35 us of per-step overhead is noise (harmless on single-TC v5e/v6e).
    if steps == 1 and B8 >= 1024:
        steps = 2
    TB = _round_up(math.ceil(B8 / steps), 8)
    Bp = steps * TB
    return TB, Bp, steps


def dqn_forward(x, params, *, tb_max=4096):
    """x: (B, NUM_FEATURES) float32 -> (B, NUM_ACTIONS) float32."""
    w1p, w2p, w3p, bp = _pad_params(params)

    B = x.shape[0]
    TB, Bp, steps = _choose_tiling(B, tb_max)

    x = x.astype(jnp.float32)
    if Bp != B:
        xp = jnp.zeros((Bp, NUM_FEATURES), jnp.float32).at[:B, :].set(x)
    else:
        xp = x

    # Activations stream over the batch grid; weights/biases are pinned to the
    # same block for every grid step (VMEM resident, DMA'd once).
    x_spec = pl.BlockSpec((TB, NUM_FEATURES), lambda i: (i, 0))
    w1_spec = pl.BlockSpec((NUM_FEATURES, H_PAD), lambda i: (0, 0))
    w2_spec = pl.BlockSpec((H_PAD, H_PAD), lambda i: (0, 0))
    w3_spec = pl.BlockSpec((H_PAD, A_PAD), lambda i: (0, 0))
    b_spec = pl.BlockSpec((8, H_PAD), lambda i: (0, 0))
    o_spec = pl.BlockSpec((TB, A_PAD), lambda i: (i, 0))

    flops = 2 * Bp * (NUM_FEATURES * H_PAD + H_PAD * H_PAD + H_PAD * A_PAD)
    weight_bytes = 4 * (NUM_FEATURES * H_PAD + H_PAD * H_PAD + H_PAD * A_PAD
                        + 8 * H_PAD)
    act_bytes = 4 * Bp * (NUM_FEATURES + A_PAD)
    cost = pl.CostEstimate(
        flops=flops, transcendentals=0, bytes_accessed=weight_bytes + act_bytes
    )

    out_padded = pl.pallas_call(
        dqn_kernel,
        out_shape=jax.ShapeDtypeStruct((Bp, A_PAD), jnp.float32),
        grid=(steps,),
        in_specs=[x_spec, w1_spec, w2_spec, w3_spec, b_spec],
        out_specs=o_spec,
        compiler_params=pltpu.CompilerParams(
            dimension_semantics=("parallel",),
        ),
        cost_estimate=cost,
    )(xp, w1p, w2p, w3p, bp)

    # Layout plumbing: strip batch padding and lane padding back to (B, 2).
    return out_padded[:B, :NUM_ACTIONS]


def init_params(key):
    """torch.nn.Linear default init: U(-1/sqrt(fan_in), 1/sqrt(fan_in)).

    Weights stored as (in_features, out_features) for x @ W; biases (1, out).
    """
    def linear_init(k, fan_in, fan_out):
        kw, kb = jax.random.split(k)
        bound = 1.0 / math.sqrt(fan_in)
        w = jax.random.uniform(kw, (fan_in, fan_out), jnp.float32, -bound, bound)
        b = jax.random.uniform(kb, (1, fan_out), jnp.float32, -bound, bound)
        return w, b

    k1, k2, k3 = jax.random.split(key, 3)
    w1, b1 = linear_init(k1, NUM_FEATURES, HIDDEN)
    w2, b2 = linear_init(k2, HIDDEN, HIDDEN)
    w3, b3 = linear_init(k3, HIDDEN, NUM_ACTIONS)
    return (w1, b1, w2, b2, w3, b3)


def reference_forward(x, params):
    """Plain-JAX reference (unpadded) for correctness checking."""
    w1, b1, w2, b2, w3, b3 = params
    h1 = jnp.maximum(x @ w1 + b1, 0.0)
    h2 = jnp.maximum(h1 @ w2 + b2, 0.0)
    return h2 @ w3 + b3


if __name__ == "__main__":
    key = jax.random.PRNGKey(0)
    k_params, k_x1, k_x2 = jax.random.split(key, 3)

    params = init_params(k_params)

    # Case 1: tiny inference-style batch (single grid step, no padding).
    x_small = jax.random.normal(k_x1, (8, NUM_FEATURES), jnp.float32)
    out_small = jax.block_until_ready(dqn_forward(x_small, params))
    ref_small = reference_forward(x_small, params)
    assert out_small.shape == (8, NUM_ACTIONS), out_small.shape
    assert jnp.allclose(out_small, ref_small, atol=1e-5, rtol=1e-5), (
        f"max abs err = {jnp.max(jnp.abs(out_small - ref_small))}"
    )

    # Case 2: non-multiple batch with batch tiling (grid > 1, batch padding).
    x_big = jax.random.normal(k_x2, (200, NUM_FEATURES), jnp.float32)
    out_big = jax.block_until_ready(dqn_forward(x_big, params, tb_max=128))
    ref_big = reference_forward(x_big, params)
    assert out_big.shape == (200, NUM_ACTIONS), out_big.shape
    assert jnp.allclose(out_big, ref_big, atol=1e-5, rtol=1e-5), (
        f"max abs err = {jnp.max(jnp.abs(out_big - ref_big))}"
    )

    print("KERNEL_OK")
</pallas_src>

<mosaic_0001>
module attributes {stable_mosaic.version = 11 : i64} {
  func.func @dqn_kernel(%arg0: i32, %arg1: memref<8x4xf32, #tpu.memory_space<vmem>>, %arg2: memref<4x128xf32, #tpu.memory_space<vmem>>, %arg3: memref<128x128xf32, #tpu.memory_space<vmem>>, %arg4: memref<128x8xf32, #tpu.memory_space<vmem>>, %arg5: memref<8x128xf32, #tpu.memory_space<vmem>>, %arg6: memref<8x8xf32, #tpu.memory_space<vmem>>) attributes {dimension_semantics = [#tpu.dimension_semantics<parallel>], iteration_bounds = array<i64: 1>, scalar_prefetch = 0 : i64, scratch_operands = 0 : i64, tpu.core_type = #tpu.core_type<tc>, window_params = [{transform_indices = @transform_0, window_bounds = array<i64: 8, 4>}, {pipeline_mode = #tpu.pipeline_mode<synchronous>, transform_indices = @transform_1, window_bounds = array<i64: 4, 128>}, {pipeline_mode = #tpu.pipeline_mode<synchronous>, transform_indices = @transform_2, window_bounds = array<i64: 128, 128>}, {pipeline_mode = #tpu.pipeline_mode<synchronous>, transform_indices = @transform_3, window_bounds = array<i64: 128, 8>}, {pipeline_mode = #tpu.pipeline_mode<synchronous>, transform_indices = @transform_4, window_bounds = array<i64: 8, 128>}, {transform_indices = @transform_5, window_bounds = array<i64: 8, 8>}]} {
    %c0 = arith.constant 0 : index
    %c0_0 = arith.constant 0 : index
    %0 = vector.load %arg1[%c0, %c0_0] : memref<8x4xf32, #tpu.memory_space<vmem>>, vector<8x4xf32>
    %c0_1 = arith.constant 0 : index
    %c0_2 = arith.constant 0 : index
    %1 = vector.load %arg5[%c0_1, %c0_2] : memref<8x128xf32, #tpu.memory_space<vmem>>, vector<1x128xf32>
    %c1 = arith.constant 1 : index
    %c0_3 = arith.constant 0 : index
    %2 = vector.load %arg5[%c1, %c0_3] : memref<8x128xf32, #tpu.memory_space<vmem>>, vector<1x128xf32>
    %c2 = arith.constant 2 : index
    %c0_4 = arith.constant 0 : index
    %3 = vector.load %arg5[%c2, %c0_4] : memref<8x128xf32, #tpu.memory_space<vmem>>, vector<1x128xf32>
    %4 = vector.extract_strided_slice %3 {offsets = [0, 0], sizes = [1, 8], strides = [1, 1]} : vector<1x128xf32> to vector<1x8xf32>
    %c0_5 = arith.constant 0 : index
    %c0_6 = arith.constant 0 : index
    %5 = vector.load %arg2[%c0_5, %c0_6] : memref<4x128xf32, #tpu.memory_space<vmem>>, vector<4x128xf32>
    %cst = arith.constant dense<0.000000e+00> : vector<8x128xf32>
    %6 = tpu.matmul %0, %5, %cst {dimension_numbers = #tpu.dot_dimension_numbers<[1], [0], [0], [1], [0, 0, 1, 1], [], []>} : vector<8x4xf32>, vector<4x128xf32>, vector<8x128xf32> -> vector<8x128xf32>
    %7 = vector.broadcast %1 : vector<1x128xf32> to vector<8x128xf32>
    %8 = arith.addf %6, %7 : vector<8x128xf32>
    %cst_7 = arith.constant 0.000000e+00 : f32
    %9 = vector.broadcast %cst_7 : f32 to vector<8x128xf32>
    %10 = arith.maximumf %8, %9 : vector<8x128xf32>
    %c0_8 = arith.constant 0 : index
    %c0_9 = arith.constant 0 : index
    %11 = vector.load %arg3[%c0_8, %c0_9] : memref<128x128xf32, #tpu.memory_space<vmem>>, vector<128x128xf32>
    %cst_10 = arith.constant dense<0.000000e+00> : vector<8x128xf32>
    %12 = tpu.matmul %10, %11, %cst_10 {dimension_numbers = #tpu.dot_dimension_numbers<[1], [0], [0], [1], [0, 0, 1, 1], [], []>} : vector<8x128xf32>, vector<128x128xf32>, vector<8x128xf32> -> vector<8x128xf32>
    %13 = vector.broadcast %2 : vector<1x128xf32> to vector<8x128xf32>
    %14 = arith.addf %12, %13 : vector<8x128xf32>
    %cst_11 = arith.constant 0.000000e+00 : f32
    %15 = vector.broadcast %cst_11 : f32 to vector<8x128xf32>
    %16 = arith.maximumf %14, %15 : vector<8x128xf32>
    %c0_12 = arith.constant 0 : index
    %c0_13 = arith.constant 0 : index
    %17 = vector.load %arg4[%c0_12, %c0_13] : memref<128x8xf32, #tpu.memory_space<vmem>>, vector<128x8xf32>
    %cst_14 = arith.constant dense<0.000000e+00> : vector<8x8xf32>
    %18 = tpu.matmul %16, %17, %cst_14 {dimension_numbers = #tpu.dot_dimension_numbers<[1], [0], [0], [1], [0, 0, 1, 1], [], []>} : vector<8x128xf32>, vector<128x8xf32>, vector<8x8xf32> -> vector<8x8xf32>
    %19 = vector.broadcast %4 : vector<1x8xf32> to vector<8x8xf32>
    %20 = arith.addf %18, %19 : vector<8x8xf32>
    %c0_15 = arith.constant 0 : index
    %c0_16 = arith.constant 0 : index
    %21 = vector.load %arg6[%c0_15, %c0_16] : memref<8x8xf32, #tpu.memory_space<vmem>>, vector<8x8xf32>
    tpu.vector_store %arg6[%c0_15, %c0_16], %20 {strides = array<i32>} : memref<8x8xf32, #tpu.memory_space<vmem>>, vector<8x8xf32>,
    return
  }
  func.func @transform_0(%arg0: i32) -> (i32, i32) {
    %c0_i32 = arith.constant 0 : i32
    %c0_i32_0 = arith.constant 0 : i32
    return %arg0, %c0_i32 : i32, i32
  }
  func.func @transform_1(%arg0: i32) -> (i32, i32) {
    %c0_i32 = arith.constant 0 : i32
    %c0_i32_0 = arith.constant 0 : i32
    %c0_i32_1 = arith.constant 0 : i32
    return %c0_i32, %c0_i32_0 : i32, i32
  }
  func.func @transform_2(%arg0: i32) -> (i32, i32) {
    %c0_i32 = arith.constant 0 : i32
    %c0_i32_0 = arith.constant 0 : i32
    %c0_i32_1 = arith.constant 0 : i32
    return %c0_i32, %c0_i32_0 : i32, i32
  }
  func.func @transform_3(%arg0: i32) -> (i32, i32) {
    %c0_i32 = arith.constant 0 : i32
    %c0_i32_0 = arith.constant 0 : i32
    %c0_i32_1 = arith.constant 0 : i32
    return %c0_i32, %c0_i32_0 : i32, i32
  }
  func.func @transform_4(%arg0: i32) -> (i32, i32) {
    %c0_i32 = arith.constant 0 : i32
    %c0_i32_0 = arith.constant 0 : i32
    %c0_i32_1 = arith.constant 0 : i32
    return %c0_i32, %c0_i32_0 : i32, i32
  }
  func.func @transform_5(%arg0: i32) -> (i32, i32) {
    %c0_i32 = arith.constant 0 : i32
    %c0_i32_0 = arith.constant 0 : i32
    return %arg0, %c0_i32 : i32, i32
  }
}

</mosaic_0001>

<llo_original>
// kernel: tpu_custom_call.1
$region0: #{tpu_custom_call.1}
  #allocation0 [shape = 'u32[]', space=smem, size = 0x4, offset = 0x4, fixed_abs, tag = 'smem constant byte address 0x4 - core index']
  #allocation1 [shape = 'u32[72,128]{1,0:T(1,128)}', space=vmem, size = 0x9000, scoped, tag = 'internal scratch']
  %s0 = inlined_call_operand.vmem [shape: f32[8,4], index: 0, kind: input, shape index: {}]
  %s1 = inlined_call_operand.vmem [shape: f32[4,128], index: 1, kind: input, shape index: {}]
  %s2 = inlined_call_operand.vmem [shape: f32[128,128], index: 2, kind: input, shape index: {}]
  %s3 = inlined_call_operand.vmem [shape: f32[128,8], index: 3, kind: input, shape index: {}]
  %s4 = inlined_call_operand.vmem [shape: f32[8,128], index: 4, kind: input, shape index: {}]
  %s5 = inlined_call_operand.hbm [shape: f32[8,8], index: 5, kind: output, shape index: {}]
  %s6 = sld [smem:[#allocation0]]
  $region30: #{tpu_custom_call.1} parent=0
    _
  %s8 = ssub.s32 1, %s6
  %s9 = scalar_select 0, %s8, %s6
  $region1: #{tpu_custom_call.1} parent=0
    #allocation2 [shape = 'u8[4096]{0}', space=vmem, size = 0x1000, scoped, tag = 'output window, operand 0, single buffered']
    #allocation3 [shape = 's32[1]{0}', space=sflag, size = 0x4, scoped, tag = 'scoped memory for tpu_custom_call.1']
    %10 = vsyncpa [#allocation3], 0
    // Predicated region
    $region2: #{tpu_custom_call.1} parent=1 // pred_check
      _
    $region3: #{tpu_custom_call.1} parent=1 // pred_check_branch
      %12 = sbr.rel (0) target = $region5
    $region4: #{tpu_custom_call.1} parent=1 // pred_region
      _
    $region5: #{tpu_custom_call.1} parent=1 // pred_fallthru
      _
    // Predicated region
    $region6: #{tpu_custom_call.1} parent=1 // pred_check
      _
    $region7: #{tpu_custom_call.1} parent=1 // pred_check_branch
      %14 = sbr.rel (0) target = $region9
    $region8: #{tpu_custom_call.1} parent=1 // pred_region
      _
    $region9: #{tpu_custom_call.1} parent=1 // pred_fallthru
      _
    // Predicated region
    $region10: #{tpu_custom_call.1} parent=1 // pred_check
      _
    $region11: #{tpu_custom_call.1} parent=1 // pred_check_branch
      %16 = sbr.rel (0) target = $region13
    $region12: #{tpu_custom_call.1} parent=1 // pred_region
      _
    $region13: #{tpu_custom_call.1} parent=1 // pred_fallthru
      _
    // Predicated region
    $region14: #{tpu_custom_call.1} parent=1 // pred_check
      _
    $region15: #{tpu_custom_call.1} parent=1 // pred_check_branch
      %18 = sbr.rel (0) target = $region17
    $region16: #{tpu_custom_call.1} parent=1 // pred_region
      _
    $region17: #{tpu_custom_call.1} parent=1 // pred_fallthru
      _
    // Predicated region
    $region18: #{tpu_custom_call.1} parent=1 // pred_check
      _
    $region19: #{tpu_custom_call.1} parent=1 // pred_check_branch
      %20 = sbr.rel (0) target = $region21
    $region20: #{tpu_custom_call.1} parent=1 // pred_region
      _
    $region21: #{tpu_custom_call.1} parent=1 // pred_fallthru
      _
    %v21 = vld [vmem:[%s0] sm:$0xff]
    %v22 = vld [vmem:[%s4] sm:$0x1]
    %v23 = vld [vmem:[%s4 + $0x1] sm:$0x1]
    %v24 = vld [vmem:[%s4 + $0x2] sm:$0x1]
    %v25 = vld [vmem:[%s1] sm:$0xf]
    %v26 = vperm.slane %v22, 0
    %vm27 = vcmask 31744
    %v29 = vsel %vm27, %v21, 0
    %vm31 = vcmask 1043456
    %v33 = vsel %vm31, %v25, 0
    %35 = vmatpush.msra.mxu0 0.0
    %36 = vmatpush.msra.mxu0 0.0
    %37 = vmatpush.msra.mxu0 0.0
    %38 = vmatpush.msra.mxu0 0.0
    %39 = vmatpush.msra.mxu0 0.0
    %40 = vmatpush.msra.mxu0 0.0
    %41 = vmatpush.msra.mxu0 0.0
    %42 = vmatpush.msra.mxu0 0.0
    %43 = vmatpush.msra.mxu0 0.0
    %44 = vmatpush.msra.mxu0 0.0
    %45 = vmatpush.msra.mxu0 0.0
    %46 = vmatpush.msra.mxu0 0.0
    %47 = vmatpush.msra.mxu0 0.0
    %48 = vmatpush.msra.mxu0 0.0
    %49 = vmatpush.msra.mxu0 0.0
    %50 = vmatpush.msra.mxu0 %v33
    %51 = vmatmul.f32.gmra.mxu0 %v29
    %v52 = vpop.f32.mrf.mxu0
    %v53 = vadd.f32 %v26, %v52
    %54 = vdwg.mxu0
    %v55 = vmax.f32 %v53, 0.0
    %v56 = vld [vmem:[%s2] sm:$0xff]
    %v57 = vld [vmem:[%s2 + $0x8] sm:$0xff]
    %v58 = vld [vmem:[%s2 + $0x10] sm:$0xff]
    %v59 = vld [vmem:[%s2 + $0x18] sm:$0xff]
    %v60 = vld [vmem:[%s2 + $0x20] sm:$0xff]
    %v61 = vld [vmem:[%s2 + $0x28] sm:$0xff]
    %v62 = vld [vmem:[%s2 + $0x30] sm:$0xff]
    %v63 = vld [vmem:[%s2 + $0x38] sm:$0xff]
    %v64 = vld [vmem:[%s2 + $0x40] sm:$0xff]
    %v65 = vld [vmem:[%s2 + $0x48] sm:$0xff]
    %v66 = vld [vmem:[%s2 + $0x50] sm:$0xff]
    %v67 = vld [vmem:[%s2 + $0x58] sm:$0xff]
    %v68 = vld [vmem:[%s2 + $0x60] sm:$0xff]
    %v69 = vld [vmem:[%s2 + $0x68] sm:$0xff]
    %v70 = vld [vmem:[%s2 + $0x70] sm:$0xff]
    %v71 = vld [vmem:[%s2 + $0x78] sm:$0xff]
    %v72 = vperm.slane %v23, 0
    %73 = vmatpush.msra.mxu0 %v71
    %74 = vmatpush.msra.mxu0 %v70
    %75 = vmatpush.msra.mxu0 %v69
    %76 = vmatpush.msra.mxu0 %v68
    %77 = vmatpush.msra.mxu0 %v67
    %78 = vmatpush.msra.mxu0 %v66
    %79 = vmatpush.msra.mxu0 %v65
    %80 = vmatpush.msra.mxu0 %v64
    %81 = vmatpush.msra.mxu0 %v63
    %82 = vmatpush.msra.mxu0 %v62
    %83 = vmatpush.msra.mxu0 %v61
    %84 = vmatpush.msra.mxu0 %v60
    %85 = vmatpush.msra.mxu0 %v59
    %86 = vmatpush.msra.mxu0 %v58
    %87 = vmatpush.msra.mxu0 %v57
    %88 = vmatpush.msra.mxu0 %v56
    %89 = vmatmul.f32.gmra.mxu0 %v55
    %v90 = vpop.f32.mrf.mxu0
    %v91 = vadd.f32 %v72, %v90
    %92 = vdwg.mxu0
    %v93 = vmax.f32 %v91, 0.0
    %v94 = vld [vmem:[%s3] sm:$0xff]
    %v95 = vld [vmem:[%s3 + $0x8] sm:$0xff]
    %v96 = vld [vmem:[%s3 + $0x10] sm:$0xff]
    %v97 = vld [vmem:[%s3 + $0x18] sm:$0xff]
    %v98 = vld [vmem:[%s3 + $0x20] sm:$0xff]
    %v99 = vld [vmem:[%s3 + $0x28] sm:$0xff]
    %v100 = vld [vmem:[%s3 + $0x30] sm:$0xff]
    %v101 = vld [vmem:[%s3 + $0x38] sm:$0xff]
    %v102 = vld [vmem:[%s3 + $0x40] sm:$0xff]
    %v103 = vld [vmem:[%s3 + $0x48] sm:$0xff]
    %v104 = vld [vmem:[%s3 + $0x50] sm:$0xff]
    %v105 = vld [vmem:[%s3 + $0x58] sm:$0xff]
    %v106 = vld [vmem:[%s3 + $0x60] sm:$0xff]
    %v107 = vld [vmem:[%s3 + $0x68] sm:$0xff]
    %v108 = vld [vmem:[%s3 + $0x70] sm:$0xff]
    %v109 = vld [vmem:[%s3 + $0x78] sm:$0xff]
    %v110 = vperm.slane %v24, 0
    %111 = vmatpush.msra.mxu0 %v109
    %112 = vmatpush.msra.mxu0 %v108
    %113 = vmatpush.msra.mxu0 %v107
    %114 = vmatpush.msra.mxu0 %v106
    %115 = vmatpush.msra.mxu0 %v105
    %116 = vmatpush.msra.mxu0 %v104
    %117 = vmatpush.msra.mxu0 %v103
    %118 = vmatpush.msra.mxu0 %v102
    %119 = vmatpush.msra.mxu0 %v101
    %120 = vmatpush.msra.mxu0 %v100
    %121 = vmatpush.msra.mxu0 %v99
    %122 = vmatpush.msra.mxu0 %v98
    %123 = vmatpush.msra.mxu0 %v97
    %124 = vmatpush.msra.mxu0 %v96
    %125 = vmatpush.msra.mxu0 %v95
    %126 = vmatpush.msra.mxu0 %v94
    %127 = vmatmul.f32.gmra.mxu0 %v93
    %v128 = vpop.f32.mrf.mxu0
    %v129 = vadd.f32 %v110, %v128
    %130 = vdwg.mxu0
    %vm131 = vcmask 64512
    %132 = vst.msk [vmem:[#allocation2] sm:$0xff] %vm131, %v129
    // Predicated region
    $region22: #{tpu_custom_call.1} parent=1 // pred_check
      _
    $region23: #{tpu_custom_call.1} parent=1 // pred_check_branch
      %134 = sbr.rel (0) target = $region25
    $region24: #{tpu_custom_call.1} parent=1 // pred_region
      %136 = vsyncadd [#allocation3], 0
      %s138 = sshll.u32 [#allocation2], 4
      %s139 = int_to_ptr.vmem [resolvable:$true] %s138
      %s140 = sshll.u32 %s5, 4
      %s141 = int_to_ptr.hbm [resolvable:$true] %s140
      %143 = dma.vmem_to_hbm [thread:$0]  %s139, 128, %s141, [#allocation3]
    $region25: #{tpu_custom_call.1} parent=1 // pred_fallthru
      _
    // Predicated region
    $region26: #{tpu_custom_call.1} parent=1 // pred_check
      _
    $region27: #{tpu_custom_call.1} parent=1 // pred_check_branch
      %145 = sbr.rel (0) target = $region29
    $region28: #{tpu_custom_call.1} parent=1 // pred_region
      %147 = dma.done [#allocation3], 128
    $region29: #{tpu_custom_call.1} parent=1 // pred_fallthru
      _
    %148 = vsyncpa [#allocation3], 1

</llo_original>
